<compile_context>
chip_gen: v6e
topology: v6e:2x2x1
jax: 0.10.0
libtpu: 0.0.40
codegen_flags: <defaults>
</compile_context>

<pallas_src>
import functools

import jax
import jax.numpy as jnp
from jax import lax
from jax.experimental import pallas as pl
from jax.experimental.pallas import tpu as pltpu


def _round_up(n, m):
    return ((n + m - 1) // m) * m


def _policy_kernel(x_ref, w1_ref, b1_ref, w2_ref, b2_ref, o_ref,
                   logit_ref, m_ref, s_ref,
                   *, batch, block, n_tiles, n_out, cache_logits):
    p = pl.program_id(0)          # 0 = stats pass, 1 = normalize pass
    j = pl.program_id(1)          # batch-tile index
    rem = batch % block           # static

    def logits_t():
        # h^T = relu(W1 @ x^T + b1): contract the feature dim of both operands
        # (A @ B^T form) so x is consumed in its native [block, 8] layout while
        # the hidden activation stays lane-dense ([10, block], batch on lanes).
        h = lax.dot_general(w1_ref[...], x_ref[...],
                            (((1,), (1,)), ((), ())),
                            preferred_element_type=jnp.float32)         # [10, block]
        h = jnp.maximum(h + b1_ref[...], 0.0)
        lt = jnp.dot(w2_ref[...], h,
                     preferred_element_type=jnp.float32) + b2_ref[...]  # [8, block]
        if rem != 0:
            # Mask the ragged tail of the last tile (and any stale VMEM behind
            # it) out of the dim=0 softmax.  Static no-op when batch % block == 0;
            # the traced limit keeps it inert on all other tiles.
            limit = jnp.where(j == n_tiles - 1, rem, block)
            col = lax.broadcasted_iota(jnp.int32, (1, block), 1)
            lt = jnp.where(col < limit, lt, -jnp.inf)
        return lt

    @pl.when(p == 0)
    def _stats_pass():
        @pl.when(j == 0)
        def _():
            m_ref[...] = jnp.full(m_ref.shape, -jnp.inf, m_ref.dtype)
            s_ref[...] = jnp.zeros(s_ref.shape, s_ref.dtype)

        lt = logits_t()
        if cache_logits:
            off = pl.multiple_of(j * block, block)
            logit_ref[:, pl.ds(off, block)] = lt

        # Online (running) max / exp-sum over the batch (lane) axis.
        m_old = m_ref[...]
        m_new = jnp.maximum(m_old, jnp.max(lt, axis=-1, keepdims=True))
        s_ref[...] = (s_ref[...] * jnp.exp(m_old - m_new)
                      + jnp.sum(jnp.exp(lt - m_new), axis=-1, keepdims=True))
        m_ref[...] = m_new

        @pl.when(j == n_tiles - 1)
        def _finalize():
            # Single per-class constant: softmax = exp(l - (m + log s)).
            m_ref[...] = m_ref[...] + jnp.log(s_ref[...])

    @pl.when(p == 1)
    def _normalize_pass():
        if cache_logits:
            off = pl.multiple_of(j * block, block)
            lt = logit_ref[:, pl.ds(off, block)]
        else:
            lt = logits_t()
        probs_t = jnp.exp(lt - m_ref[...])          # [8, block], lane-dense
        # [8, block] -> [block, 8] (XLU transpose), drop the padded classes,
        # and store the [block, 4] output tile directly.
        o_ref[...] = probs_t.T[:, :n_out]


@functools.partial(jax.jit, static_argnames=("block_batch", "max_cache_bytes"))
def policy_forward(x, w1, b1, w2, b2, block_batch=8192,
                   max_cache_bytes=16 * 1024 * 1024):
    """Forward pass of `Policy`: softmax(relu(x @ W1^T + b1) @ W2^T + b2, dim=0).

    x: [B, 8] f32; W1: [10, 8]; b1: [10]; W2: [4, 10]; b2: [4].  Returns [B, 4].
    """
    batch, n_in = x.shape
    n_hidden = w1.shape[0]
    n_out = w2.shape[0]

    x = x.astype(jnp.float32)
    w1 = w1.astype(jnp.float32)
    b1 = b1.reshape(n_hidden, 1).astype(jnp.float32)

    # Pad the (tiny) second-layer params to 8 output rows so every in-kernel
    # shape is sublane-aligned; the padded classes never reach the output.
    n_pad = _round_up(max(n_out, 8), 8)
    w2p = jnp.zeros((n_pad, n_hidden), jnp.float32).at[:n_out].set(
        w2.astype(jnp.float32))
    b2p = jnp.zeros((n_pad, 1), jnp.float32).at[:n_out].set(
        b2.reshape(n_out, 1).astype(jnp.float32))

    # Batch tile size: lane-aligned (multiple of 128), shrunk for tiny batches.
    block = min(int(block_batch), _round_up(batch, 128))
    block = max(128, _round_up(block, 128))
    n_tiles = pl.cdiv(batch, block)

    # Cache pass-0 logits in VMEM when they fit; otherwise recompute in pass 1
    # from a second read of x.
    cache_bytes = 4 * n_pad * n_tiles * block
    cache_logits = cache_bytes <= int(max_cache_bytes)
    cache_cols = n_tiles * block if cache_logits else 128

    kernel = functools.partial(
        _policy_kernel, batch=batch, block=block, n_tiles=n_tiles,
        n_out=n_out, cache_logits=cache_logits)

    const_map = lambda p, j: (0, 0)
    if cache_logits:
        # x is only needed in pass 0; freeze its block index in pass 1 so no
        # extra DMA is issued.
        x_map = lambda p, j: (j * (1 - p) + (n_tiles - 1) * p, 0)
    else:
        x_map = lambda p, j: (j, 0)
    # Output blocks are only written in pass 1; during pass 0 the index is pinned
    # to 0 and that buffer is fully overwritten at step (1, 0) before its first
    # write-back, so exactly n_tiles correct blocks reach HBM.
    out_map = lambda p, j: (j * p, 0)

    # VMEM sizing (x / out blocks are lane-padded to 128 inside VMEM).
    vmem_est = 7 * 512 * block + 4 * n_pad * cache_cols + (4 << 20)
    cp_kwargs = dict(dimension_semantics=("arbitrary", "arbitrary"))
    if vmem_est > (32 << 20):
        cp_kwargs["vmem_limit_bytes"] = int(vmem_est)

    return pl.pallas_call(
        kernel,
        out_shape=jax.ShapeDtypeStruct((batch, n_out), jnp.float32),
        grid_spec=pltpu.PrefetchScalarGridSpec(
            num_scalar_prefetch=0,
            grid=(2, n_tiles),
            in_specs=[
                pl.BlockSpec((block, n_in), x_map),
                pl.BlockSpec(w1.shape, const_map),
                pl.BlockSpec(b1.shape, const_map),
                pl.BlockSpec(w2p.shape, const_map),
                pl.BlockSpec(b2p.shape, const_map),
            ],
            out_specs=pl.BlockSpec((block, n_out), out_map),
            scratch_shapes=[
                pltpu.VMEM((n_pad, cache_cols), jnp.float32),   # logits cache
                pltpu.VMEM((n_pad, 1), jnp.float32),            # running max -> c
                pltpu.VMEM((n_pad, 1), jnp.float32),            # running exp-sum
            ]),
        compiler_params=pltpu.CompilerParams(**cp_kwargs),
    )(x, w1, b1, w2p, b2p)


def init_params(key):
    # nn.Linear-style U(-1/sqrt(fan_in), 1/sqrt(fan_in)) init, PyTorch layout:
    # W [out, in], b [out].
    k1, k2, k3, k4 = jax.random.split(key, 4)
    lim1 = 1.0 / jnp.sqrt(8.0)
    lim2 = 1.0 / jnp.sqrt(10.0)
    w1 = jax.random.uniform(k1, (10, 8), jnp.float32, -lim1, lim1)
    b1 = jax.random.uniform(k2, (10,), jnp.float32, -lim1, lim1)
    w2 = jax.random.uniform(k3, (4, 10), jnp.float32, -lim2, lim2)
    b2 = jax.random.uniform(k4, (4,), jnp.float32, -lim2, lim2)
    return w1, b1, w2, b2


def reference_forward(x, w1, b1, w2, b2):
    h = jnp.maximum(x @ w1.T + b1, 0.0)
    logits = h @ w2.T + b2
    return jax.nn.softmax(logits, axis=0)      # dim=0, matching the PyTorch module


if __name__ == "__main__":
    key = jax.random.PRNGKey(0)
    kx, kp = jax.random.split(key)
    w1, b1, w2, b2 = init_params(kp)

    # Primary small case (obs dim 8 -> 10 -> 4, batch 5).
    B = 5
    x = jax.random.normal(kx, (B, 8), jnp.float32)
    out = jax.block_until_ready(policy_forward(x, w1, b1, w2, b2))
    ref = reference_forward(x, w1, b1, w2, b2)
    assert out.shape == (B, 4)
    assert jnp.allclose(out, ref, atol=1e-4, rtol=1e-4), \
        float(jnp.max(jnp.abs(out - ref)))

    # Multi-tile batch with a ragged last tile: exercises the cross-tile dim=0
    # reduction, the last-tile mask, and the VMEM logits cache.
    B2 = 300
    x2 = jax.random.normal(jax.random.PRNGKey(1), (B2, 8), jnp.float32)
    out2 = jax.block_until_ready(
        policy_forward(x2, w1, b1, w2, b2, block_batch=128))
    ref2 = reference_forward(x2, w1, b1, w2, b2)
    assert jnp.allclose(out2, ref2, atol=1e-4, rtol=1e-4), \
        float(jnp.max(jnp.abs(out2 - ref2)))

    # Same shapes with the logits cache disabled: exercises the pass-2
    # recompute fallback used when the cache would not fit VMEM.
    out3 = jax.block_until_ready(
        policy_forward(x2, w1, b1, w2, b2, block_batch=128, max_cache_bytes=0))
    assert jnp.allclose(out3, ref2, atol=1e-4, rtol=1e-4), \
        float(jnp.max(jnp.abs(out3 - ref2)))

    print("KERNEL_OK")
</pallas_src>

<mosaic_0001>
module attributes {stable_mosaic.version = 11 : i64} {
  func.func @_policy_kernel(%arg0: i32, %arg1: i32, %arg2: memref<128x8xf32, #tpu.memory_space<vmem>>, %arg3: memref<10x8xf32, #tpu.memory_space<vmem>>, %arg4: memref<10x1xf32, #tpu.memory_space<vmem>>, %arg5: memref<8x10xf32, #tpu.memory_space<vmem>>, %arg6: memref<8x1xf32, #tpu.memory_space<vmem>>, %arg7: memref<128x4xf32, #tpu.memory_space<vmem>>, %arg8: memref<8x128xf32, #tpu.memory_space<vmem>>, %arg9: memref<8x1xf32, #tpu.memory_space<vmem>>, %arg10: memref<8x1xf32, #tpu.memory_space<vmem>>) attributes {dimension_semantics = [#tpu.dimension_semantics<arbitrary>, #tpu.dimension_semantics<arbitrary>], iteration_bounds = array<i64: 2, 1>, scalar_prefetch = 0 : i64, scratch_operands = 3 : i64, tpu.core_type = #tpu.core_type<tc>, window_params = [{transform_indices = @transform_0, window_bounds = array<i64: 128, 8>}, {pipeline_mode = #tpu.pipeline_mode<synchronous>, transform_indices = @transform_1, window_bounds = array<i64: 10, 8>}, {pipeline_mode = #tpu.pipeline_mode<synchronous>, transform_indices = @transform_2, window_bounds = array<i64: 10, 1>}, {pipeline_mode = #tpu.pipeline_mode<synchronous>, transform_indices = @transform_3, window_bounds = array<i64: 8, 10>}, {pipeline_mode = #tpu.pipeline_mode<synchronous>, transform_indices = @transform_4, window_bounds = array<i64: 8, 1>}, {transform_indices = @transform_5, window_bounds = array<i64: 128, 4>}]} {
    %c0_i32 = arith.constant 0 : i32
    %0 = arith.cmpi eq, %arg0, %c0_i32 : i32
    %1 = arith.extui %0 : i1 to i32
    %c0_i32_0 = arith.constant 0 : i32
    %2 = arith.cmpi ne, %1, %c0_i32_0 : i32
    scf.if %2 {
      %c0_i32_2 = arith.constant 0 : i32
      %6 = arith.cmpi eq, %arg1, %c0_i32_2 : i32
      %7 = arith.extui %6 : i1 to i32
      %c0_i32_3 = arith.constant 0 : i32
      %8 = arith.cmpi ne, %7, %c0_i32_3 : i32
      scf.if %8 {
        %cst_31 = arith.constant 0xFF800000 : f32
        %54 = vector.broadcast %cst_31 : f32 to vector<8x1xf32>
        %c0_32 = arith.constant 0 : index
        %c0_33 = arith.constant 0 : index
        %55 = vector.load %arg9[%c0_32, %c0_33] : memref<8x1xf32, #tpu.memory_space<vmem>>, vector<8x1xf32>
        tpu.vector_store %arg9[%c0_32, %c0_33], %54 {strides = array<i32>} : memref<8x1xf32, #tpu.memory_space<vmem>>, vector<8x1xf32>,
        %cst_34 = arith.constant 0.000000e+00 : f32
        %56 = vector.broadcast %cst_34 : f32 to vector<8x1xf32>
        %c0_35 = arith.constant 0 : index
        %c0_36 = arith.constant 0 : index
        %57 = vector.load %arg10[%c0_35, %c0_36] : memref<8x1xf32, #tpu.memory_space<vmem>>, vector<8x1xf32>
        tpu.vector_store %arg10[%c0_35, %c0_36], %56 {strides = array<i32>} : memref<8x1xf32, #tpu.memory_space<vmem>>, vector<8x1xf32>,
      } else {
      }
      %c0 = arith.constant 0 : index
      %c0_4 = arith.constant 0 : index
      %9 = vector.load %arg3[%c0, %c0_4] : memref<10x8xf32, #tpu.memory_space<vmem>>, vector<10x8xf32>
      %c0_5 = arith.constant 0 : index
      %c0_6 = arith.constant 0 : index
      %10 = vector.load %arg2[%c0_5, %c0_6] : memref<128x8xf32, #tpu.memory_space<vmem>>, vector<128x8xf32>
      %cst = arith.constant dense<0.000000e+00> : vector<10x128xf32>
      %11 = tpu.matmul %9, %10, %cst {dimension_numbers = #tpu.dot_dimension_numbers<[1], [1], [0], [0], [0, 0, 1, 0], [], []>} : vector<10x8xf32>, vector<128x8xf32>, vector<10x128xf32> -> vector<10x128xf32>
      %c0_7 = arith.constant 0 : index
      %c0_8 = arith.constant 0 : index
      %12 = vector.load %arg4[%c0_7, %c0_8] : memref<10x1xf32, #tpu.memory_space<vmem>>, vector<10x1xf32>
      %13 = vector.broadcast %12 : vector<10x1xf32> to vector<10x128xf32>
      %14 = arith.addf %11, %13 : vector<10x128xf32>
      %cst_9 = arith.constant 0.000000e+00 : f32
      %15 = vector.broadcast %cst_9 : f32 to vector<10x128xf32>
      %16 = arith.maximumf %14, %15 : vector<10x128xf32>
      %c0_10 = arith.constant 0 : index
      %c0_11 = arith.constant 0 : index
      %17 = vector.load %arg5[%c0_10, %c0_11] : memref<8x10xf32, #tpu.memory_space<vmem>>, vector<8x10xf32>
      %cst_12 = arith.constant dense<0.000000e+00> : vector<8x128xf32>
      %18 = tpu.matmul %17, %16, %cst_12 {dimension_numbers = #tpu.dot_dimension_numbers<[1], [0], [0], [1], [0, 0, 1, 1], [], []>} : vector<8x10xf32>, vector<10x128xf32>, vector<8x128xf32> -> vector<8x128xf32>
      %c0_13 = arith.constant 0 : index
      %c0_14 = arith.constant 0 : index
      %19 = vector.load %arg6[%c0_13, %c0_14] : memref<8x1xf32, #tpu.memory_space<vmem>>, vector<8x1xf32>
      %20 = vector.broadcast %19 : vector<8x1xf32> to vector<8x128xf32>
      %21 = arith.addf %18, %20 : vector<8x128xf32>
      %c0_i32_15 = arith.constant 0 : i32
      %22 = arith.cmpi eq, %arg1, %c0_i32_15 : i32
      %c5_i32 = arith.constant 5 : i32
      %c128_i32 = arith.constant 128 : i32
      %23 = arith.select %22, %c5_i32, %c128_i32 : i32
      %24 = tpu.iota {dimensions = array<i32: 1>} : vector<1x128xi32>
      %25 = vector.broadcast %23 : i32 to vector<1x128xi32>
      %26 = arith.cmpi slt, %24, %25 : vector<1x128xi32>
      %cst_16 = arith.constant 0xFF800000 : f32
      %27 = vector.shape_cast %26 : vector<1x128xi1> to vector<1x128xi1>
      %28 = vector.broadcast %27 : vector<1x128xi1> to vector<8x128xi1>
      %29 = vector.broadcast %cst_16 : f32 to vector<8x128xf32>
      %30 = arith.select %28, %21, %29 : vector<8x128xi1>, vector<8x128xf32>
      %c128_i32_17 = arith.constant 128 : i32
      %31 = arith.muli %arg1, %c128_i32_17 : i32
      %32 = tpu.assume_multiple %31, 128 : i32
      %c0_18 = arith.constant 0 : index
      %33 = arith.index_cast %32 : i32 to index
      %34 = vector.load %arg8[%c0_18, %33] : memref<8x128xf32, #tpu.memory_space<vmem>>, vector<8x128xf32>
      tpu.vector_store %arg8[%c0_18, %33], %30 {strides = array<i32>} : memref<8x128xf32, #tpu.memory_space<vmem>>, vector<8x128xf32>,
      %c0_19 = arith.constant 0 : index
      %c0_20 = arith.constant 0 : index
      %35 = vector.load %arg9[%c0_19, %c0_20] : memref<8x1xf32, #tpu.memory_space<vmem>>, vector<8x1xf32>
      %cst_21 = arith.constant dense<0xFF800000> : vector<8xf32>
      %36 = vector.multi_reduction <maximumf>, %30, %cst_21 [1] : vector<8x128xf32> to vector<8xf32>
      %37 = vector.shape_cast %36 : vector<8xf32> to vector<8x1xf32>
      %38 = arith.maximumf %35, %37 : vector<8x1xf32>
      %c0_22 = arith.constant 0 : index
      %c0_23 = arith.constant 0 : index
      %39 = vector.load %arg10[%c0_22, %c0_23] : memref<8x1xf32, #tpu.memory_space<vmem>>, vector<8x1xf32>
      %40 = arith.subf %35, %38 : vector<8x1xf32>
      %41 = math.exp %40 : vector<8x1xf32>
      %42 = arith.mulf %39, %41 : vector<8x1xf32>
      %43 = vector.broadcast %38 : vector<8x1xf32> to vector<8x128xf32>
      %44 = arith.subf %30, %43 : vector<8x128xf32>
      %45 = math.exp %44 : vector<8x128xf32>
      %cst_24 = arith.constant dense<0.000000e+00> : vector<8xf32>
      %46 = vector.multi_reduction <add>, %45, %cst_24 [1] : vector<8x128xf32> to vector<8xf32>
      %47 = vector.shape_cast %46 : vector<8xf32> to vector<8x1xf32>
      %48 = arith.addf %42, %47 : vector<8x1xf32>
      %c0_25 = arith.constant 0 : index
      %c0_26 = arith.constant 0 : index
      %49 = vector.load %arg10[%c0_25, %c0_26] : memref<8x1xf32, #tpu.memory_space<vmem>>, vector<8x1xf32>
      tpu.vector_store %arg10[%c0_25, %c0_26], %48 {strides = array<i32>} : memref<8x1xf32, #tpu.memory_space<vmem>>, vector<8x1xf32>,
      %c0_27 = arith.constant 0 : index
      %c0_28 = arith.constant 0 : index
      %50 = vector.load %arg9[%c0_27, %c0_28] : memref<8x1xf32, #tpu.memory_space<vmem>>, vector<8x1xf32>
      tpu.vector_store %arg9[%c0_27, %c0_28], %38 {strides = array<i32>} : memref<8x1xf32, #tpu.memory_space<vmem>>, vector<8x1xf32>,
      %c0_i32_29 = arith.constant 0 : i32
      %51 = arith.cmpi eq, %arg1, %c0_i32_29 : i32
      %52 = arith.extui %51 : i1 to i32
      %c0_i32_30 = arith.constant 0 : i32
      %53 = arith.cmpi ne, %52, %c0_i32_30 : i32
      scf.if %53 {
        %c0_31 = arith.constant 0 : index
        %c0_32 = arith.constant 0 : index
        %54 = vector.load %arg9[%c0_31, %c0_32] : memref<8x1xf32, #tpu.memory_space<vmem>>, vector<8x1xf32>
        %c0_33 = arith.constant 0 : index
        %c0_34 = arith.constant 0 : index
        %55 = vector.load %arg10[%c0_33, %c0_34] : memref<8x1xf32, #tpu.memory_space<vmem>>, vector<8x1xf32>
        %56 = math.log %55 : vector<8x1xf32>
        %57 = arith.addf %54, %56 : vector<8x1xf32>
        %c0_35 = arith.constant 0 : index
        %c0_36 = arith.constant 0 : index
        %58 = vector.load %arg9[%c0_35, %c0_36] : memref<8x1xf32, #tpu.memory_space<vmem>>, vector<8x1xf32>
        tpu.vector_store %arg9[%c0_35, %c0_36], %57 {strides = array<i32>} : memref<8x1xf32, #tpu.memory_space<vmem>>, vector<8x1xf32>,
      } else {
      }
    } else {
    }
    %c1_i32 = arith.constant 1 : i32
    %3 = arith.cmpi eq, %arg0, %c1_i32 : i32
    %4 = arith.extui %3 : i1 to i32
    %c0_i32_1 = arith.constant 0 : i32
    %5 = arith.cmpi ne, %4, %c0_i32_1 : i32
    scf.if %5 {
      %c128_i32 = arith.constant 128 : i32
      %6 = arith.muli %arg1, %c128_i32 : i32
      %7 = tpu.assume_multiple %6, 128 : i32
      %c0 = arith.constant 0 : index
      %8 = arith.index_cast %7 : i32 to index
      %9 = vector.load %arg8[%c0, %8] : memref<8x128xf32, #tpu.memory_space<vmem>>, vector<8x128xf32>
      %c0_2 = arith.constant 0 : index
      %c0_3 = arith.constant 0 : index
      %10 = vector.load %arg9[%c0_2, %c0_3] : memref<8x1xf32, #tpu.memory_space<vmem>>, vector<8x1xf32>
      %11 = vector.broadcast %10 : vector<8x1xf32> to vector<8x128xf32>
      %12 = arith.subf %9, %11 : vector<8x128xf32>
      %13 = math.exp %12 : vector<8x128xf32>
      %14 = tpu.transpose %13, [1, 0] : vector<8x128xf32> -> vector<128x8xf32>
      %15 = vector.extract_strided_slice %14 {offsets = [0, 0], sizes = [128, 4], strides = [1, 1]} : vector<128x8xf32> to vector<128x4xf32>
      %c0_4 = arith.constant 0 : index
      %c0_5 = arith.constant 0 : index
      %16 = vector.load %arg7[%c0_4, %c0_5] : memref<128x4xf32, #tpu.memory_space<vmem>>, vector<128x4xf32>
      tpu.vector_store %arg7[%c0_4, %c0_5], %15 {strides = array<i32>} : memref<128x4xf32, #tpu.memory_space<vmem>>, vector<128x4xf32>,
    } else {
    }
    return
  }
  func.func @transform_0(%arg0: i32, %arg1: i32) -> (i32, i32) {
    %c1_i32 = arith.constant 1 : i32
    %0 = arith.subi %c1_i32, %arg0 : i32
    %1 = arith.muli %arg1, %0 : i32
    %c0_i32 = arith.constant 0 : i32
    %2 = arith.muli %c0_i32, %arg0 : i32
    %3 = arith.addi %1, %2 : i32
    %c0_i32_0 = arith.constant 0 : i32
    %c0_i32_1 = arith.constant 0 : i32
    return %3, %c0_i32_0 : i32, i32
  }
  func.func @transform_1(%arg0: i32, %arg1: i32) -> (i32, i32) {
    %c0_i32 = arith.constant 0 : i32
    %c0_i32_0 = arith.constant 0 : i32
    %c0_i32_1 = arith.constant 0 : i32
    return %c0_i32, %c0_i32_0 : i32, i32
  }
  func.func @transform_2(%arg0: i32, %arg1: i32) -> (i32, i32) {
    %c0_i32 = arith.constant 0 : i32
    %c0_i32_0 = arith.constant 0 : i32
    %c0_i32_1 = arith.constant 0 : i32
    return %c0_i32, %c0_i32_0 : i32, i32
  }
  func.func @transform_3(%arg0: i32, %arg1: i32) -> (i32, i32) {
    %c0_i32 = arith.constant 0 : i32
    %c0_i32_0 = arith.constant 0 : i32
    %c0_i32_1 = arith.constant 0 : i32
    return %c0_i32, %c0_i32_0 : i32, i32
  }
  func.func @transform_4(%arg0: i32, %arg1: i32) -> (i32, i32) {
    %c0_i32 = arith.constant 0 : i32
    %c0_i32_0 = arith.constant 0 : i32
    %c0_i32_1 = arith.constant 0 : i32
    return %c0_i32, %c0_i32_0 : i32, i32
  }
  func.func @transform_5(%arg0: i32, %arg1: i32) -> (i32, i32) {
    %0 = arith.muli %arg1, %arg0 : i32
    %c0_i32 = arith.constant 0 : i32
    %c0_i32_0 = arith.constant 0 : i32
    return %0, %c0_i32 : i32, i32
  }
}

</mosaic_0001>

<llo_original>
// kernel: policy_forward.1
$region0: #{policy_forward.1}
  #allocation0 [shape = 'u32[]', space=smem, size = 0x4, offset = 0x4, fixed_abs, tag = 'smem constant byte address 0x4 - core index']
  #allocation1 [shape = 'u32[144,128]{1,0:T(1,128)}', space=vmem, size = 0x12000, scoped, tag = 'internal scratch']
  #allocation2 [shape = 'f32[8,128]{1,0:T(8,128)}', space=vmem, size = 0x1000, scoped, tag = 'scratch operand']
  #allocation3 [shape = 'f32[8,1]{1,0:T(8,128)}', space=vmem, size = 0x1000, scoped, tag = 'scratch operand']
  #allocation4 [shape = 'f32[8,1]{1,0:T(8,128)}', space=vmem, size = 0x1000, scoped, tag = 'scratch operand']
  %s0 = inlined_call_operand.vmem [shape: f32[5,8], index: 0, kind: input, shape index: {}]
  %s1 = inlined_call_operand.vmem [shape: f32[10,8], index: 1, kind: input, shape index: {}]
  %s2 = inlined_call_operand.vmem [shape: f32[10,1], index: 2, kind: input, shape index: {}]
  %s3 = inlined_call_operand.vmem [shape: f32[8,10], index: 3, kind: input, shape index: {}]
  %s4 = inlined_call_operand.vmem [shape: f32[8,1], index: 4, kind: input, shape index: {}]
  %s5 = inlined_call_operand.vmem [shape: f32[5,4], index: 5, kind: output, shape index: {}]
  %s6 = sld [smem:[#allocation0]]
  $region103: #{policy_forward.1} parent=0
    _
  %s8 = ssub.s32 1, %s6
  %s9 = scalar_select 0, %s8, %s6
  $region1: #{policy_forward.1} parent=0
    #allocation5 [shape = 'u8[131072]{0}', space=vmem, size = 0x20000, scoped, tag = 'output window, operand 0']
    loop: start=0, step=1, limit=4
    $region2: #{policy_forward.1} parent=1 // loop_pre_header
      _
    $region3: #{policy_forward.1} parent=1 // loop_header
      %s11 = sphi 0, %s15
      %p12 = scmp.ge.s32.totalorder %s11, 4
      %s18 = sphi 0, %s30
      %s19 = sphi 0, %s26
      %s20 = sphi 0, %s18
      %s21 = sphi 0, %s19
      %s22 = sphi 0, %s20
      %s23 = sphi 0, %s21
      %s37 = sphi 0, %s39
      %s40 = sphi 0, %s37
      %s41 = sphi 0, %s40
      %s57 = sphi 0, %s41
      %s61 = sphi 0, %s61
      %s63 = sphi 0, %s61
      %s64 = sphi 0, %s63
      %s78 = sphi 0, %s64
      %s82 = sphi 0, %s82
      %s84 = sphi 0, %s82
      %s85 = sphi 0, %s84
      %s99 = sphi 0, %s85
      %s103 = sphi 0, %s103
      %s105 = sphi 0, %s103
      %s106 = sphi 0, %s105
      %s120 = sphi 0, %s106
      %s124 = sphi 0, %s124
      %s126 = sphi 0, %s124
      %s127 = sphi 0, %s126
      %s141 = sphi 0, %s127
      %s149 = sphi 0, %s151
      %s152 = sphi 0, %s149
      %s153 = sphi 0, %s152
      %s169 = sphi 0, %s153
    $region4: #{policy_forward.1} parent=1 // loop_header_branch
      %14 = sbr.rel (%p12) target = $region8
    $region5: #{policy_forward.1} parent=1 // loop_body
      %s16 = ssub.s32 %s11, 1
      %s17 = ssub.s32 %s11, 2
      %s24 = sadd.s32 1, %s19
      %p25 = scmp.ge.s32.totalorder %s24, 1
      %s26 = scalar_select %p25, 0, %s24
      %s27 = sadd.s32 1, %s18
      %s28 = scalar_select %p25, %s27, %s18
      %p29 = scmp.ge.s32.totalorder %s28, 2
      %s30 = scalar_select %p29, 0, %s28
      %s31 = ssub.s32 1, %s18
      %s32 = smul.u32 %s19, %s31
      %s33 = ssub.s32 1, %s30
      %s34 = smul.u32 %s26, %s33
      %s35 = ssub.s32 %s32, %s34
      %p36 = scmp.eq.s32.totalorder %s35, 0
      %s38 = sadd.s32 %s37, 1
      %s39 = scalar_select %p36, %s37, %s38
      %p42 = pneg %p36
      %p43 = scmp.eq.s32.totalorder %s11, 1
      %p44 = por %p42, %p43
      %p45 = scmp.ne.s32.totalorder %s37, %s40
      %p46 = scmp.eq.s32.totalorder %s11, 0
      %p47 = por %p45, %p46
      %p48 = scmp.ne.s32.totalorder %s37, %s40
      %p49 = scmp.eq.s32.totalorder %s16, 1
      %p50 = por %p48, %p49
      %p51 = scmp.ne.s32.totalorder %s40, %s41
      %p52 = scmp.eq.s32.totalorder %s16, 0
      %p53 = por %p51, %p52
      %p54 = scmp.ne.s32.totalorder %s40, %s41
      %p55 = scmp.eq.s32.totalorder %s17, 1
      %p56 = por %p54, %p55
      %p58 = scmp.ne.s32.totalorder %s41, %s57
      %p59 = scmp.eq.s32.totalorder %s17, 0
      %p60 = por %p58, %p59
      %s62 = sadd.s32 %s61, 1
      %p65 = scmp.eq.s32.totalorder %s11, 1
      %p66 = scmp.ne.s32.totalorder %s61, %s63
      %p67 = scmp.eq.s32.totalorder %s11, 0
      %p68 = por %p66, %p67
      %p69 = scmp.ne.s32.totalorder %s61, %s63
      %p70 = scmp.eq.s32.totalorder %s16, 1
      %p71 = por %p69, %p70
      %p72 = scmp.ne.s32.totalorder %s63, %s64
      %p73 = scmp.eq.s32.totalorder %s16, 0
      %p74 = por %p72, %p73
      %p75 = scmp.ne.s32.totalorder %s63, %s64
      %p76 = scmp.eq.s32.totalorder %s17, 1
      %p77 = por %p75, %p76
      %p79 = scmp.ne.s32.totalorder %s64, %s78
      %p80 = scmp.eq.s32.totalorder %s17, 0
      %p81 = por %p79, %p80
      %s83 = sadd.s32 %s82, 1
      %p86 = scmp.eq.s32.totalorder %s11, 1
      %p87 = scmp.ne.s32.totalorder %s82, %s84
      %p88 = scmp.eq.s32.totalorder %s11, 0
      %p89 = por %p87, %p88
      %p90 = scmp.ne.s32.totalorder %s82, %s84
      %p91 = scmp.eq.s32.totalorder %s16, 1
      %p92 = por %p90, %p91
      %p93 = scmp.ne.s32.totalorder %s84, %s85
      %p94 = scmp.eq.s32.totalorder %s16, 0
      %p95 = por %p93, %p94
      %p96 = scmp.ne.s32.totalorder %s84, %s85
      %p97 = scmp.eq.s32.totalorder %s17, 1
      %p98 = por %p96, %p97
      %p100 = scmp.ne.s32.totalorder %s85, %s99
      %p101 = scmp.eq.s32.totalorder %s17, 0
      %p102 = por %p100, %p101
      %s104 = sadd.s32 %s103, 1
      %p107 = scmp.eq.s32.totalorder %s11, 1
      %p108 = scmp.ne.s32.totalorder %s103, %s105
      %p109 = scmp.eq.s32.totalorder %s11, 0
      %p110 = por %p108, %p109
      %p111 = scmp.ne.s32.totalorder %s103, %s105
      %p112 = scmp.eq.s32.totalorder %s16, 1
      %p113 = por %p111, %p112
      %p114 = scmp.ne.s32.totalorder %s105, %s106
      %p115 = scmp.eq.s32.totalorder %s16, 0
      %p116 = por %p114, %p115
      %p117 = scmp.ne.s32.totalorder %s105, %s106
      %p118 = scmp.eq.s32.totalorder %s17, 1
      %p119 = por %p117, %p118
      %p121 = scmp.ne.s32.totalorder %s106, %s120
      %p122 = scmp.eq.s32.totalorder %s17, 0
      %p123 = por %p121, %p122
      %s125 = sadd.s32 %s124, 1
      %p128 = scmp.eq.s32.totalorder %s11, 1
      %p129 = scmp.ne.s32.totalorder %s124, %s126
      %p130 = scmp.eq.s32.totalorder %s11, 0
      %p131 = por %p129, %p130
      %p132 = scmp.ne.s32.totalorder %s124, %s126
      %p133 = scmp.eq.s32.totalorder %s16, 1
      %p134 = por %p132, %p133
      %p135 = scmp.ne.s32.totalorder %s126, %s127
      %p136 = scmp.eq.s32.totalorder %s16, 0
      %p137 = por %p135, %p136
      %p138 = scmp.ne.s32.totalorder %s126, %s127
      %p139 = scmp.eq.s32.totalorder %s17, 1
      %p140 = por %p138, %p139
      %p142 = scmp.ne.s32.totalorder %s127, %s141
      %p143 = scmp.eq.s32.totalorder %s17, 0
      %p144 = por %p142, %p143
      %s145 = smul.u32 %s19, %s18
      %s146 = smul.u32 %s26, %s30
      %s147 = ssub.s32 %s145, %s146
      %p148 = scmp.eq.s32.totalorder %s147, 0
      %s150 = sadd.s32 %s149, 1
      %s151 = scalar_select %p148, %s149, %s150
      %p154 = pneg %p148
      %p155 = scmp.eq.s32.totalorder %s11, 1
      %p156 = por %p154, %p155
      %p157 = scmp.ne.s32.totalorder %s149, %s152
      %p158 = scmp.eq.s32.totalorder %s11, 0
      %p159 = por %p157, %p158
      %p160 = scmp.ne.s32.totalorder %s149, %s152
      %p161 = scmp.eq.s32.totalorder %s16, 1
      %p162 = por %p160, %p161
      %p163 = scmp.ne.s32.totalorder %s152, %s153
      %p164 = scmp.eq.s32.totalorder %s16, 0
      %p165 = por %p163, %p164
      %p166 = scmp.ne.s32.totalorder %s152, %s153
      %p167 = scmp.eq.s32.totalorder %s17, 1
      %p168 = por %p166, %p167
      %p170 = scmp.ne.s32.totalorder %s153, %s169
      %p171 = scmp.eq.s32.totalorder %s17, 0
      %p172 = por %p170, %p171
      %p173 = scmp.le.s32.totalorder 1, %s11
      %p174 = scmp.lt.s32.totalorder %s11, 3
      %p175 = pnand %p173, %p174
      %p176 = pneg %p175
      // Predicated region
      $region9: #{policy_forward.1} parent=5 // pred_check
        _
      $region10: #{policy_forward.1} parent=5 // pred_check_branch
        %178 = sbr.rel (%p175) target = $region12
      $region11: #{policy_forward.1} parent=5 // pred_region
        %s179 = ssub.s32 %s11, 1
        // Predicated region
        $region13: #{policy_forward.1} parent=11 // pred_check
          %p180 = pneg %p74
        $region14: #{policy_forward.1} parent=11 // pred_check_branch
          %182 = sbr.rel (%p180) target = $region16
        $region15: #{policy_forward.1} parent=11 // pred_region
          _
        $region16: #{policy_forward.1} parent=11 // pred_fallthru
          _
        // Predicated region
        $region17: #{policy_forward.1} parent=11 // pred_check
          %p183 = pneg %p95
        $region18: #{policy_forward.1} parent=11 // pred_check_branch
          %185 = sbr.rel (%p183) target = $region20
        $region19: #{policy_forward.1} parent=11 // pred_region
          _
        $region20: #{policy_forward.1} parent=11 // pred_fallthru
          _
        // Predicated region
        $region21: #{policy_forward.1} parent=11 // pred_check
          %p186 = pneg %p116
        $region22: #{policy_forward.1} parent=11 // pred_check_branch
          %188 = sbr.rel (%p186) target = $region24
        $region23: #{policy_forward.1} parent=11 // pred_region
          _
        $region24: #{policy_forward.1} parent=11 // pred_fallthru
          _
        // Predicated region
        $region25: #{policy_forward.1} parent=11 // pred_check
          %p189 = pneg %p137
        $region26: #{policy_forward.1} parent=11 // pred_check_branch
          %191 = sbr.rel (%p189) target = $region28
        $region27: #{policy_forward.1} parent=11 // pred_region
          _
        $region28: #{policy_forward.1} parent=11 // pred_fallthru
          _
      $region12: #{policy_forward.1} parent=5 // pred_fallthru
        _
      %p192 = scmp.lt.s32.totalorder %s11, 2
      // Predicated region
      $region29: #{policy_forward.1} parent=5 // pred_check
        %p193 = pneg %p192
      $region30: #{policy_forward.1} parent=5 // pred_check_branch
        %195 = sbr.rel (%p193) target = $region32
      $region31: #{policy_forward.1} parent=5 // pred_region
        // Predicated region
        $region33: #{policy_forward.1} parent=31 // pred_check
          %p196 = pneg %p47
        $region34: #{policy_forward.1} parent=31 // pred_check_branch
          %198 = sbr.rel (%p196) target = $region36
        $region35: #{policy_forward.1} parent=31 // pred_region
          %s199 = ssub.s32 1, %s18
          %s200 = smul.u32 %s19, %s199
          %s201 = smul.u32 16, %s200
          %s202 = ssub.s32 1, %s201
          %s203 = smul.u32 128, %s202
          %p204 = scmp.lt.s32.totalorder %s201, 0
          %s205 = scalar_select %p204, %s201, 0
          %s206 = smul.addr %s205, 8
          %s207 = scalar_lea.vmem %s0, %s206
          %s208 = ssub.s32 1, %s18
          %s209 = smul.u32 %s19, %s208
          %s210 = smul.u32 16, %s209
          %s211 = ssub.s32 1, %s210
          %s212 = smul.u32 128, %s211
        $region36: #{policy_forward.1} parent=31 // pred_fallthru
          _
      $region32: #{policy_forward.1} parent=5 // pred_fallthru
        _
      %p213 = scmp.le.s32.totalorder 1, %s11
      %p214 = scmp.lt.s32.totalorder %s11, 3
      %p215 = pnand %p213, %p214
      %p216 = pneg %p215
      // Predicated region
      $region37: #{policy_forward.1} parent=5 // pred_check
        _
      $region38: #{policy_forward.1} parent=5 // pred_check_branch
        %218 = sbr.rel (%p215) target = $region40
      $region39: #{policy_forward.1} parent=5 // pred_region
        %s219 = ssub.s32 %s11, 1
        %s220 = ssub.s32 1, %s20
        %s221 = smul.u32 %s21, %s220
        %s222 = smul.u32 16, %s221
        %s223 = ssub.s32 1, %s222
        %s224 = smul.u32 128, %s223
        %p225 = scmp.lt.s32.totalorder %s222, 0
        %s226 = scalar_select %p225, %s222, 0
        %s227 = smul.addr %s226, 8
        %s228 = scalar_lea.vmem %s0, %s227
        %p229 = pneg %p53
        %p230 = pneg %p50
        %p231 = pneg %p74
        %p232 = pneg %p71
        %p233 = pneg %p95
        %p234 = pneg %p92
        %p235 = pneg %p116
        %p236 = pneg %p113
        %p237 = pneg %p137
        %p238 = pneg %p134
        %p239 = pneg %p165
        %p240 = pneg %p162
        %s241 = sand.u32 %s152, 1
        %s242 = sand.u32 %s152, 1
        %s243 = smul.addr %s242, 128
        %s244 = scalar_lea.vmem [#allocation5], %s243
        %s245 = ssub.s32 1, %s20
        %s246 = smul.u32 %s21, %s245
        %s247 = smul.u32 16, %s246
        %s248 = ssub.s32 1, %s247
        %s249 = smul.u32 128, %s248
        %p250 = scmp.lt.s32.totalorder %s247, 0
        %s251 = scalar_select %p250, %s247, 0
        %s252 = smul.addr %s251, 8
        %s253 = scalar_lea.vmem %s0, %s252
        %s254 = ssub.s32 1, %s20
        %s255 = smul.u32 %s21, %s254
        %s256 = smul.u32 16, %s255
        %s257 = ssub.s32 1, %s256
        %s258 = smul.u32 128, %s257
        %s259 = smul.u32 %s21, %s20
        %s260 = smul.u32 16, %s259
        %s261 = ssub.s32 1, %s260
        %s262 = smul.u32 128, %s261
        %p263 = scmp.eq.s32.totalorder %s20, 0
        // Predicated region
        $region41: #{policy_forward.1} parent=39 // pred_check
          %p264 = pneg %p263
        $region42: #{policy_forward.1} parent=39 // pred_check_branch
          %266 = sbr.rel (%p264) target = $region44
        $region43: #{policy_forward.1} parent=39 // pred_region
          %p267 = scmp.eq.s32.totalorder %s21, 0
          // Predicated region
          $region45: #{policy_forward.1} parent=43 // pred_check
            %p268 = pneg %p267
          $region46: #{policy_forward.1} parent=43 // pred_check_branch
            %270 = sbr.rel (%p268) target = $region48
          $region47: #{policy_forward.1} parent=43 // pred_region
            %vm271 = vcmask 7168
            %272 = vst.msk [vmem:[#allocation3] sm:$0xff] %vm271, -inf
            %273 = vst.msk [vmem:[#allocation4] sm:$0xff] %vm271, 0.0
          $region48: #{policy_forward.1} parent=43 // pred_fallthru
            _
          %v274 = vld [vmem:[%s1] sm:$0xff]
          %v275 = vld [vmem:[%s1 + $0x8] sm:$0x3]
          %v276 = vld [vmem:[%s253] sm:$0xff]
          %v277 = vld [vmem:[%s253 + $0x8] sm:$0xff]
          %v278 = vld [vmem:[%s253 + $0x10] sm:$0xff]
          %v279 = vld [vmem:[%s253 + $0x18] sm:$0xff]
          %v280 = vld [vmem:[%s253 + $0x20] sm:$0xff]
          %v281 = vld [vmem:[%s253 + $0x28] sm:$0xff]
          %v282 = vld [vmem:[%s253 + $0x30] sm:$0xff]
          %v283 = vld [vmem:[%s253 + $0x38] sm:$0xff]
          %v284 = vld [vmem:[%s253 + $0x40] sm:$0xff]
          %v285 = vld [vmem:[%s253 + $0x48] sm:$0xff]
          %v286 = vld [vmem:[%s253 + $0x50] sm:$0xff]
          %v287 = vld [vmem:[%s253 + $0x58] sm:$0xff]
          %v288 = vld [vmem:[%s253 + $0x60] sm:$0xff]
          %v289 = vld [vmem:[%s253 + $0x68] sm:$0xff]
          %v290 = vld [vmem:[%s253 + $0x70] sm:$0xff]
          %v291 = vld [vmem:[%s253 + $0x78] sm:$0xff]
          %v292 = vld [vmem:[%s2] sm:$0xff]
          %v293 = vld [vmem:[%s2 + $0x8] sm:$0x3]
          %295 = vset.pattern.permute.xlu0 0
          %296 = vperm.xlu0 %295, %v292
          %v297 = vpop.permute.xlu0 %296
          %300 = vset.pattern.permute.xlu0 0
          %301 = vperm.xlu0 %300, %v293
          %v302 = vpop.permute.xlu0 %301
          %vm304 = vcmask 64512
          %v306 = vsel %vm304, %v274, 0
          %v309 = vsel %vm304, %v275, 0
          %v312 = vsel %vm304, %v276, 0
          %v315 = vsel %vm304, %v277, 0
          %v318 = vsel %vm304, %v278, 0
          %v321 = vsel %vm304, %v279, 0
          %v324 = vsel %vm304, %v280, 0
          %v327 = vsel %vm304, %v281, 0
          %v330 = vsel %vm304, %v282, 0
          %v333 = vsel %vm304, %v283, 0
          %v336 = vsel %vm304, %v284, 0
          %v339 = vsel %vm304, %v285, 0
          %v342 = vsel %vm304, %v286, 0
          %v345 = vsel %vm304, %v287, 0
          %v348 = vsel %vm304, %v288, 0
          %v351 = vsel %vm304, %v289, 0
          %v354 = vsel %vm304, %v290, 0
          %v357 = vsel %vm304, %v291, 0
          %359 = vmatprep.subr.mxu0 0.0
          %360 = vmatpush1.xpose.msra.mxu0 %v357
          %361 = vmatprep.subr.mxu0 0.0
          %362 = vmatpush1.xpose.msra.mxu0 %v354
          %363 = vmatprep.subr.mxu0 0.0
          %364 = vmatpush1.xpose.msra.mxu0 %v351
          %365 = vmatprep.subr.mxu0 0.0
          %366 = vmatpush1.xpose.msra.mxu0 %v348
          %367 = vmatprep.subr.mxu0 0.0
          %368 = vmatpush1.xpose.msra.mxu0 %v345
          %369 = vmatprep.subr.mxu0 0.0
          %370 = vmatpush1.xpose.msra.mxu0 %v342
          %371 = vmatprep.subr.mxu0 0.0
          %372 = vmatpush1.xpose.msra.mxu0 %v339
          %373 = vmatprep.subr.mxu0 0.0
          %374 = vmatpush1.xpose.msra.mxu0 %v336
          %375 = vmatprep.subr.mxu0 0.0
          %376 = vmatpush1.xpose.msra.mxu0 %v333
          %377 = vmatprep.subr.mxu0 0.0
          %378 = vmatpush1.xpose.msra.mxu0 %v330
          %379 = vmatprep.subr.mxu0 0.0
          %380 = vmatpush1.xpose.msra.mxu0 %v327
          %381 = vmatprep.subr.mxu0 0.0
          %382 = vmatpush1.xpose.msra.mxu0 %v324
          %383 = vmatprep.subr.mxu0 0.0
          %384 = vmatpush1.xpose.msra.mxu0 %v321
          %385 = vmatprep.subr.mxu0 0.0
          %386 = vmatpush1.xpose.msra.mxu0 %v318
          %387 = vmatprep.subr.mxu0 0.0
          %388 = vmatpush1.xpose.msra.mxu0 %v315
          %389 = vmatprep.subr.mxu0 0.0
          %390 = vmatpush1.xpose.msra.mxu0 %v312
          %391 = vmatprep.subr.mxu0 0.0
          %392 = vmatpush2.xpose.msra.mxu0 0.0
          %393 = vmatprep.subr.mxu0 0.0
          %394 = vmatpush2.xpose.msra.mxu0 0.0
          %395 = vmatprep.subr.mxu0 0.0
          %396 = vmatpush2.xpose.msra.mxu0 0.0
          %397 = vmatprep.subr.mxu0 0.0
          %398 = vmatpush2.xpose.msra.mxu0 0.0
          %399 = vmatprep.subr.mxu0 0.0
          %400 = vmatpush2.xpose.msra.mxu0 0.0
          %401 = vmatprep.subr.mxu0 0.0
          %402 = vmatpush2.xpose.msra.mxu0 0.0
          %403 = vmatprep.subr.mxu0 0.0
          %404 = vmatpush2.xpose.msra.mxu0 0.0
          %405 = vmatprep.subr.mxu0 0.0
          %406 = vmatpush2.xpose.msra.mxu0 0.0
          %407 = vmatprep.subr.mxu0 0.0
          %408 = vmatpush2.xpose.msra.mxu0 0.0
          %409 = vmatprep.subr.mxu0 0.0
          %410 = vmatpush2.xpose.msra.mxu0 0.0
          %411 = vmatprep.subr.mxu0 0.0
          %412 = vmatpush2.xpose.msra.mxu0 0.0
          %413 = vmatprep.subr.mxu0 0.0
          %414 = vmatpush2.xpose.msra.mxu0 0.0
          %415 = vmatprep.subr.mxu0 0.0
          %416 = vmatpush2.xpose.msra.mxu0 0.0
          %417 = vmatprep.subr.mxu0 0.0
          %418 = vmatpush2.xpose.msra.mxu0 0.0
          %419 = vmatprep.subr.mxu0 0.0
          %420 = vmatpush2.xpose.msra.mxu0 0.0
          %421 = vmatprep.subr.mxu0 0.0
          %422 = vmatpush2.xpose.msra.mxu0 0.0
          %423 = vmatprep.mubr.f32.mxu0 0.0
          %424 = vmatmul.mubr.f32.gmra.mxu0 %v306
          %v425 = vpop.f32.mrf.mxu0
          %v426 = vadd.f32 %v297, %v425
          %v427 = vpop.f32.mrf.mxu0
          %428 = vmatprep.mubr.f32.mxu0 0.0
          %429 = vmatmul.mubr.f32.gmra.mxu0 %v309
          %v430 = vpop.f32.mrf.mxu0
          %v431 = vadd.f32 %v302, %v430
          %v432 = vpop.f32.mrf.mxu0
          %433 = vdwg.mxu0
          %v434 = vmax.f32 %v426, 0.0
          %v435 = vmax.f32 %v431, 0.0
          %v436 = vld [vmem:[%s3] sm:$0xff]
          %v437 = vld [vmem:[%s4] sm:$0xff]
          %439 = vset.pattern.permute.xlu0 0
          %440 = vperm.xlu0 %439, %v437
          %v441 = vpop.permute.xlu0 %440
          %vm443 = vcmask 80896
          %v445 = vsel %vm443, %v436, 0
          %vm447 = vcmask 1041408
          %v449 = vsel %vm447, %v435, 0
          %451 = vmatprep.subr.mxu0 0.0
          %452 = vmatpush1.msra.mxu0 0.0
          %453 = vmatprep.subr.mxu0 0.0
          %454 = vmatpush1.msra.mxu0 0.0
          %455 = vmatprep.subr.mxu0 0.0
          %456 = vmatpush1.msra.mxu0 0.0
          %457 = vmatprep.subr.mxu0 0.0
          %458 = vmatpush1.msra.mxu0 0.0
          %459 = vmatprep.subr.mxu0 0.0
          %460 = vmatpush1.msra.mxu0 0.0
          %461 = vmatprep.subr.mxu0 0.0
          %462 = vmatpush1.msra.mxu0 0.0
          %463 = vmatprep.subr.mxu0 0.0
          %464 = vmatpush1.msra.mxu0 0.0
          %465 = vmatprep.subr.mxu0 0.0
          %466 = vmatpush1.msra.mxu0 0.0
          %467 = vmatprep.subr.mxu0 0.0
          %468 = vmatpush1.msra.mxu0 0.0
          %469 = vmatprep.subr.mxu0 0.0
          %470 = vmatpush1.msra.mxu0 0.0
          %471 = vmatprep.subr.mxu0 0.0
          %472 = vmatpush1.msra.mxu0 0.0
          %473 = vmatprep.subr.mxu0 0.0
          %474 = vmatpush1.msra.mxu0 0.0
          %475 = vmatprep.subr.mxu0 0.0
          %476 = vmatpush1.msra.mxu0 0.0
          %477 = vmatprep.subr.mxu0 0.0
          %478 = vmatpush1.msra.mxu0 0.0
          %479 = vmatprep.subr.mxu0 0.0
          %480 = vmatpush1.msra.mxu0 %v449
          %481 = vmatprep.subr.mxu0 0.0
          %482 = vmatpush1.msra.mxu0 %v434
          %483 = vmatprep.subr.mxu0 0.0
          %484 = vmatpush2.msra.mxu0 0.0
          %485 = vmatprep.subr.mxu0 0.0
          %486 = vmatpush2.msra.mxu0 0.0
          %487 = vmatprep.subr.mxu0 0.0
          %488 = vmatpush2.msra.mxu0 0.0
          %489 = vmatprep.subr.mxu0 0.0
          %490 = vmatpush2.msra.mxu0 0.0
          %491 = vmatprep.subr.mxu0 0.0
          %492 = vmatpush2.msra.mxu0 0.0
          %493 = vmatprep.subr.mxu0 0.0
          %494 = vmatpush2.msra.mxu0 0.0
          %495 = vmatprep.subr.mxu0 0.0
          %496 = vmatpush2.msra.mxu0 0.0
          %497 = vmatprep.subr.mxu0 0.0
          %498 = vmatpush2.msra.mxu0 0.0
          %499 = vmatprep.subr.mxu0 0.0
          %500 = vmatpush2.msra.mxu0 0.0
          %501 = vmatprep.subr.mxu0 0.0
          %502 = vmatpush2.msra.mxu0 0.0
          %503 = vmatprep.subr.mxu0 0.0
          %504 = vmatpush2.msra.mxu0 0.0
          %505 = vmatprep.subr.mxu0 0.0
          %506 = vmatpush2.msra.mxu0 0.0
          %507 = vmatprep.subr.mxu0 0.0
          %508 = vmatpush2.msra.mxu0 0.0
          %509 = vmatprep.subr.mxu0 0.0
          %510 = vmatpush2.msra.mxu0 0.0
          %511 = vmatprep.subr.mxu0 0.0
          %512 = vmatpush2.msra.mxu0 0.0
          %513 = vmatprep.subr.mxu0 0.0
          %514 = vmatpush2.msra.mxu0 0.0
          %515 = vmatprep.mubr.f32.mxu0 0.0
          %516 = vmatmul.mubr.f32.gmra.mxu0 %v445
          %v517 = vpop.f32.mrf.mxu0
          %v518 = vadd.f32 %v441, %v517
          %v519 = vpop.f32.mrf.mxu0
          %520 = vdwg.mxu0
          %s521 = scalar_select %p267, 5, 128
          %v522 = vlaneseq
          %v523 = vand.u32 %v522, 127
          %v524 = vstv %s521
          %vm525 = vcmp.lt.s32.totalorder %v523, %v524
          %v526 = vsel %vm525, 1, 0
          %vm527 = vcmp.eq.s32.totalorder %v526, 1
          %v528 = vsel %vm527, %v518, -inf
          %s529 = smul.u32 %s21, 128
          %s530 = sshra.s32 %s529, 7
          %s531 = sand.u32 %s529, 127
          %s532 = scalar_lea.vmem [#allocation2], %s530
          %533 = vst [vmem:[%s532] sm:$0xff] %v528
          %v534 = vld [vmem:[#allocation3] sm:$0xff]
          %535 = vmax.xlane.f32.xlu0 %v528
          %v536 = vpop.xlane.xlu0 %535
          %v537 = vmax.f32 %v534, %v536
          %v538 = vld [vmem:[#allocation4] sm:$0xff]
          %v539 = vsub.f32 %v534, %v537
          %v540 = vmul.f32 %v539, 1.442695
          %v541 = vpow.pop %v540
          %v542 = vmul.f32 %v538, %v541
          %544 = vset.pattern.permute.xlu0 0
          %545 = vperm.xlu0 %544, %v537
          %v546 = vpop.permute.xlu0 %545
          %v548 = vsub.f32 %v528, %v546
          %v549 = vmul.f32 %v548, 1.442695
          %v550 = vpow.pop %v549
          %551 = vadd.xlane.f32.xlu0 %v550
          %v552 = vpop.xlane.xlu0 %551
          %v553 = vadd.f32 %v542, %v552
          %vm554 = vcmask 7168
          %555 = vst.msk [vmem:[#allocation4] sm:$0xff] %vm554, %v553
          %556 = vst.msk [vmem:[#allocation3] sm:$0xff] %vm554, %v537
          // Predicated region
          $region49: #{policy_forward.1} parent=43 // pred_check
            %p557 = pneg %p267
          $region50: #{policy_forward.1} parent=43 // pred_check_branch
            %559 = sbr.rel (%p557) target = $region52
          $region51: #{policy_forward.1} parent=43 // pred_region
            %v560 = vld [vmem:[#allocation3] sm:$0xff]
            %v561 = vld [vmem:[#allocation4] sm:$0xff]
            %v562 = vlog2.pop %v561
            %v563 = vmul.f32 %v562, 0.6931472
            %v564 = vadd.f32 %v560, %v563
            %565 = vst.msk [vmem:[#allocation3] sm:$0xff] %vm554, %v564
          $region52: #{policy_forward.1} parent=43 // pred_fallthru
            _
        $region44: #{policy_forward.1} parent=39 // pred_fallthru
          _
        %p566 = scmp.eq.s32.totalorder %s20, 1
        // Predicated region
        $region53: #{policy_forward.1} parent=39 // pred_check
          %p567 = pneg %p566
        $region54: #{policy_forward.1} parent=39 // pred_check_branch
          %569 = sbr.rel (%p567) target = $region56
        $region55: #{policy_forward.1} parent=39 // pred_region
          %s570 = smul.u32 %s21, 128
          %s571 = sshra.s32 %s570, 7
          %s572 = sand.u32 %s570, 127
          %s573 = scalar_lea.vmem [#allocation2], %s571
          %v574 = vld [vmem:[%s573] sm:$0xff]
          %v575 = vld [vmem:[#allocation3] sm:$0xff]
          %577 = vset.pattern.permute.xlu0 0
          %578 = vperm.xlu0 %577, %v575
          %v579 = vpop.permute.xlu0 %578
          %v581 = vsub.f32 %v574, %v579
          %v582 = vmul.f32 %v581, 1.442695
          %v583 = vpow.pop %v582
          %584 = vxpose.xlu0.b32.start [1/16] %v583, 128
          %585 = vxpose.xlu0.b32.cont [2/16] 0.0, 128
          %586 = vxpose.xlu0.b32.cont [3/16] 0.0, 128
          %587 = vxpose.xlu0.b32.cont [4/16] 0.0, 128
          %588 = vxpose.xlu0.b32.cont [5/16] 0.0, 128
          %589 = vxpose.xlu0.b32.cont [6/16] 0.0, 128
          %590 = vxpose.xlu0.b32.cont [7/16] 0.0, 128
          %591 = vxpose.xlu0.b32.cont [8/16] 0.0, 128
          %592 = vxpose.xlu0.b32.cont [9/16] 0.0, 128
          %593 = vxpose.xlu0.b32.cont [10/16] 0.0, 128
          %594 = vxpose.xlu0.b32.cont [11/16] 0.0, 128
          %595 = vxpose.xlu0.b32.cont [12/16] 0.0, 128
          %596 = vxpose.xlu0.b32.cont [13/16] 0.0, 128
          %597 = vxpose.xlu0.b32.cont [14/16] 0.0, 128
          %598 = vxpose.xlu0.b32.cont [15/16] 0.0, 128
          %599 = vxpose.xlu0.b32.end [16/16] 0.0, 128
          %v600 = vpop.trf.xlu0
          %v601 = vpop.trf.xlu0
          %v602 = vpop.trf.xlu0
          %v603 = vpop.trf.xlu0
          %v604 = vpop.trf.xlu0
          %v605 = vpop.trf.xlu0
          %v606 = vpop.trf.xlu0
          %v607 = vpop.trf.xlu0
          %v608 = vpop.trf.xlu0
          %v609 = vpop.trf.xlu0
          %v610 = vpop.trf.xlu0
          %v611 = vpop.trf.xlu0
          %v612 = vpop.trf.xlu0
          %v613 = vpop.trf.xlu0
          %v614 = vpop.trf.xlu0
          %v615 = vpop.trf.xlu0
          %vm616 = vcmask 31744
          %617 = vst.msk [vmem:[%s244] sm:$0xff] %vm616, %v600
          %618 = vst.msk [vmem:[%s244 + $0x8] sm:$0xff] %vm616, %v601
          %619 = vst.msk [vmem:[%s244 + $0x10] sm:$0xff] %vm616, %v602
          %620 = vst.msk [vmem:[%s244 + $0x18] sm:$0xff] %vm616, %v603
          %621 = vst.msk [vmem:[%s244 + $0x20] sm:$0xff] %vm616, %v604
          %622 = vst.msk [vmem:[%s244 + $0x28] sm:$0xff] %vm616, %v605
          %623 = vst.msk [vmem:[%s244 + $0x30] sm:$0xff] %vm616, %v606
          %624 = vst.msk [vmem:[%s244 + $0x38] sm:$0xff] %vm616, %v607
          %625 = vst.msk [vmem:[%s244 + $0x40] sm:$0xff] %vm616, %v608
          %626 = vst.msk [vmem:[%s244 + $0x48] sm:$0xff] %vm616, %v609
          %627 = vst.msk [vmem:[%s244 + $0x50] sm:$0xff] %vm616, %v610
          %628 = vst.msk [vmem:[%s244 + $0x58] sm:$0xff] %vm616, %v611
          %629 = vst.msk [vmem:[%s244 + $0x60] sm:$0xff] %vm616, %v612
          %630 = vst.msk [vmem:[%s244 + $0x68] sm:$0xff] %vm616, %v613
          %631 = vst.msk [vmem:[%s244 + $0x70] sm:$0xff] %vm616, %v614
          %632 = vst.msk [vmem:[%s244 + $0x78] sm:$0xff] %vm616, %v615
        $region56: #{policy_forward.1} parent=39 // pred_fallthru
          _
        %s633 = sand.u32 %s152, 1
        %s634 = sand.u32 %s152, 1
        %s635 = smul.addr %s634, 128
        %s636 = scalar_lea.vmem [#allocation5], %s635
        // Predicated region
        $region57: #{policy_forward.1} parent=39 // pred_check
          %p637 = pneg %p162
        $region58: #{policy_forward.1} parent=39 // pred_check_branch
          %639 = sbr.rel (%p637) target = $region60
        $region59: #{policy_forward.1} parent=39 // pred_region
          %s640 = smul.u32 %s21, %s20
          %s641 = smul.u32 16, %s640
          %s642 = ssub.s32 1, %s641
          %s643 = smul.u32 128, %s642
          %p644 = scmp.ne.s32.totalorder 0, %s643
          %s645 = smul.addr %s641, 8
          %s646 = scalar_lea.vmem %s5, %s645
          // Predicated region
          $region61: #{policy_forward.1} parent=59 // pred_check
            %p647 = pneg %p644
          $region62: #{policy_forward.1} parent=59 // pred_check_branch
            %649 = sbr.rel (%p647) target = $region64
          $region63: #{policy_forward.1} parent=59 // pred_region
            // Predicated region
            $region65: #{policy_forward.1} parent=63 // pred_check
              _
            $region66: #{policy_forward.1} parent=63 // pred_check_branch
              %651 = sbr.rel (0) target = $region68
            $region67: #{policy_forward.1} parent=63 // pred_region
              // Predicated region
              $region80: #{policy_forward.1} parent=67 // pred_check
                _
              $region81: #{policy_forward.1} parent=67 // pred_check_branch
                %675 = sbr.rel (0) target = $region83
              $region82: #{policy_forward.1} parent=67 // pred_region
                // While loop
                $region84: #{policy_forward.1} parent=82 // loop_pre_header
                  _
                $region85: #{policy_forward.1} parent=82 // loop_header
                  %s677 = sphi 0, %s679
                  %p678 = scmp.ge.s32.totalorder %s677, %s642
                  %s682 = sphi 0, %s689
                  %s683 = sphi %s636, %s692
                  %s684 = sphi %s646, %s693
                $region86: #{policy_forward.1} parent=82 // loop_header_branch
                  %681 = sbr.rel (%p678) target = $region90
                $region87: #{policy_forward.1} parent=82 // loop_body
                  %v685 = vld [vmem:[%s683] sm:$0xff]
                  %686 = vst [vmem:[%s684] sm:$0xff] %v685
                  %s687 = sadd.s32 1, %s682
                  %p688 = scmp.ge.s32.totalorder %s687, %s642
                  %s689 = scalar_select %p688, 0, %s687
                  %s690 = smul.u32 %s689, 8
                  %s691 = smul.u32 %s689, 8
                  %s692 = scalar_lea.vmem %s636, %s690 [#allocation5]
                  %s693 = scalar_lea.vmem %s646, %s691
                $region88: #{policy_forward.1} parent=82 // loop_footer
                  %s679 = sadd.s32 %s677, 1
                $region89: #{policy_forward.1} parent=82 // loop_footer_branch
                  %676 = sbr.rel target = $region85
                $region90: #{policy_forward.1} parent=82 // loop_exit
                  _
              $region83: #{policy_forward.1} parent=67 // pred_fallthru
                _
              // Predicated region
              $region91: #{policy_forward.1} parent=67 // pred_check
                _
              $region92: #{policy_forward.1} parent=67 // pred_check_branch
                %695 = sbr.rel target = $region94
              $region93: #{policy_forward.1} parent=67 // pred_region
                _
              $region94: #{policy_forward.1} parent=67 // pred_fallthru
                _
            $region68: #{policy_forward.1} parent=63 // pred_fallthru
              _
            // Predicated region
            $region69: #{policy_forward.1} parent=63 // pred_check
              _
            $region70: #{policy_forward.1} parent=63 // pred_check_branch
              %653 = sbr.rel target = $region72
            $region71: #{policy_forward.1} parent=63 // pred_region
              %s655 = ssub.s32 256, 1
              // While loop
              $region73: #{policy_forward.1} parent=71 // loop_pre_header
                _
              $region74: #{policy_forward.1} parent=71 // loop_header
                %s657 = sphi 0, %s659
                %p658 = scmp.ge.s32.totalorder %s657, %s642
                %s662 = sphi 0, %s669
                %s663 = sphi %s636, %s672
                %s664 = sphi %s646, %s673
              $region75: #{policy_forward.1} parent=71 // loop_header_branch
                %661 = sbr.rel (%p658) target = $region79
              $region76: #{policy_forward.1} parent=71 // loop_body
                %v665 = vld [vmem:[%s663] sm:%s655]
                %666 = vst [vmem:[%s664] sm:%s655] %v665
                %s667 = sadd.s32 1, %s662
                %p668 = scmp.ge.s32.totalorder %s667, %s642
                %s669 = scalar_select %p668, 0, %s667
                %s670 = smul.u32 %s669, 8
                %s671 = smul.u32 %s669, 8
                %s672 = scalar_lea.vmem %s636, %s670 [#allocation5]
                %s673 = scalar_lea.vmem %s646, %s671
              $region77: #{policy_forward.1} parent=71 // loop_footer
                %s659 = sadd.s32 %s657, 1
              $region78: #{policy_forward.1} parent=71 // loop_footer_branch
                %656 = sbr.rel target = $region74
              $region79: #{policy_forward.1} parent=71 // loop_exit
                _
            $region72: #{policy_forward.1} parent=63 // pred_fallthru
              _
          $region64: #{policy_forward.1} parent=59 // pred_fallthru
            _
          %696 = vnop
        $region60: #{policy_forward.1} parent=39 // pred_fallthru
          _
      $region40: #{policy_forward.1} parent=5 // pred_fallthru
        _
      %p697 = scmp.le.s32.totalorder 2, %s11
      // Predicated region
      $region95: #{policy_forward.1} parent=5 // pred_check
        %p698 = pneg %p697
      $region96: #{policy_forward.1} parent=5 // pred_check_branch
        %700 = sbr.rel (%p698) target = $region98
      $region97: #{policy_forward.1} parent=5 // pred_region
        %s701 = ssub.s32 %s11, 2
        // Predicated region
        $region99: #{policy_forward.1} parent=97 // pred_check
          %p702 = pneg %p168
        $region100: #{policy_forward.1} parent=97 // pred_check_branch
          %704 = sbr.rel (%p702) target = $region102
        $region101: #{policy_forward.1} parent=97 // pred_region
          %s705 = sand.u32 %s153, 1
          %s706 = sand.u32 %s153, 1
          %s707 = smul.addr %s706, 128
          %s708 = scalar_lea.vmem [#allocation5], %s707
        $region102: #{policy_forward.1} parent=97 // pred_fallthru
          _
      $region98: #{policy_forward.1} parent=5 // pred_fallthru
        _
    $region6: #{policy_forward.1} parent=1 // loop_footer
      %s15 = sadd.s32 1, %s11
    $region7: #{policy_forward.1} parent=1 // loop_footer_branch
      %10 = sbr.rel target = $region3
    $region8: #{policy_forward.1} parent=1 // loop_exit
      _

</llo_original>
